<compile_context>
chip_gen: v7x
topology: tpu7x:2x2x1
jax: 0.10.0
libtpu: 0.0.40
codegen_flags: <defaults>
</compile_context>

<pallas_src>
import functools
import math

import jax
import jax.numpy as jnp
from jax import lax
from jax.experimental import pallas as pl
from jax.experimental.pallas import tpu as pltpu


_DEFAULT_VMEM_BUDGET = 24 * 1024 * 1024   # pipeline working-set budget (bytes)


def _head_matmul_kernel(x_ref, w_ref, b_ref, o_ref, acc_ref, *, k_total):
    """out[b] = W @ x[b] + bias, accumulated over the (optional) K grid axis.

    x_ref  : [Bt, Kt, TS]    activations (lane axis = spatial)
    w_ref  : [C_out, Kt]     weights
    b_ref  : [C_out, 1]      bias (f32)
    o_ref  : [Bt, C_out, TS] output
    acc_ref: [Bt, C_out, TS] f32 scratch, resident across the K axis
    """
    k = pl.program_id(2)
    nk = pl.num_programs(2)

    @pl.when(k == 0)
    def _():
        acc_ref[...] = jnp.zeros_like(acc_ref)

    kt = w_ref.shape[1]
    ragged_k = (k_total % kt) != 0          # static python bool
    wb = w_ref[...]
    if ragged_k:
        # Zero the out-of-range K columns of the (padded) last block: padded
        # reads are undefined, and we must not let garbage reach the MXU.
        col = lax.broadcasted_iota(jnp.int32, (1, kt), 1)
        wb = jnp.where(k * kt + col < k_total, wb, jnp.zeros_like(wb))

    for bi in range(x_ref.shape[0]):        # static unroll over grouped batches
        xb = x_ref[bi]
        if ragged_k:
            row = lax.broadcasted_iota(jnp.int32, (kt, 1), 0)
            xb = jnp.where(k * kt + row < k_total, xb, jnp.zeros_like(xb))
        # Default MXU precision; accumulate in f32.
        acc_ref[bi] += jnp.dot(wb, xb, preferred_element_type=jnp.float32)

    @pl.when(k == nk - 1)
    def _():
        o_ref[...] = (acc_ref[...] + b_ref[...][None]).astype(o_ref.dtype)


def _const_spec(block_shape, index_map):
    """BlockSpec for blocks with a constant index_map: single-buffer them."""
    buffered = getattr(pl, "Buffered", None)
    if buffered is not None:
        try:
            return pl.BlockSpec(block_shape, index_map,
                                pipeline_mode=buffered(1))
        except TypeError:
            pass
    return pl.BlockSpec(block_shape, index_map)


def _plan_tiles(B, K, S, C_out, x_item, out_item, w_item, budget):
    """Pick (bt, kt, ts) so the pipelined working set stays under `budget`,
    preferring large lane tiles (the kernel is HBM-bandwidth-bound)."""
    def rd128(n):
        return max((n // 128) * 128, 128)

    const_bytes = C_out * K * w_item + C_out * 4            # w + bias (1 buf)

    # 1) Full-K path: maximize the lane tile under the budget.
    #    per lane column: x (double-buffered) + out (double-buffered) + acc.
    per_lane = 2 * K * x_item + 2 * C_out * out_item + C_out * 4
    ts_fit = (budget - const_bytes) // per_lane
    kt = K
    if ts_fit >= 128 or K <= 128:
        ts = int(max(min(ts_fit, 32768), 128))
        ts = S if ts >= S else rd128(ts)
    else:
        # 2) K too large for the full-K block: tile K (accumulator path).
        ts = S if S <= 8192 else rd128(8192)
        fixed = 2 * C_out * ts * out_item + C_out * ts * 4 + C_out * 4
        per_k = 2 * ts * x_item + 2 * C_out * w_item
        kt = int((budget - fixed) // max(per_k, 1))
        kt = max((kt // 128) * 128, 128)
        if kt >= K:
            kt = K

    # 3) Tiny spatial volumes: group batches per grid step to amortize the
    #    fixed per-step overhead (small-lane stores are inherently masked).
    bt = 1
    if kt == K and B > 1 and ts == S and S < 512:
        per_b = 2 * K * ts * x_item + (2 * out_item + 4) * C_out * ts
        cap = min(B,
                  max((budget - const_bytes) // max(per_b, 1), 1),
                  max(4096 // max(ts, 1), 1))
        bt = max(d for d in range(1, B + 1) if B % d == 0 and d <= cap)

    # 4) Huge-S single-step grids: split so both v7x TensorCores get work.
    if bt == 1 and kt == K and B == 1 and ts >= S and S >= 16384:
        ts = rd128(-(-S // 2))

    return int(bt), int(kt), int(ts)


def head_matmul_pallas(x_bks, w_ok, b_o, *, vmem_budget_bytes=None):
    """out[b, o, s] = sum_k w_ok[o, k] * x_bks[b, k, s] + b_o[o].

    x_bks: [B, K, S]   (channel-second layout, spatial axis last / lane-dense)
    w_ok : [C_out, K]
    b_o  : [C_out]
    returns: [B, C_out, S]   (same dtype as x_bks; f32 accumulation inside)
    """
    B, K, S = x_bks.shape
    C_out = w_ok.shape[0]

    x_item = jnp.dtype(x_bks.dtype).itemsize
    out_dtype = x_bks.dtype
    out_item = jnp.dtype(out_dtype).itemsize
    w_item = jnp.dtype(w_ok.dtype).itemsize

    if vmem_budget_bytes is None:
        vmem_budget_bytes = _DEFAULT_VMEM_BUDGET
    vmem_budget_bytes = int(vmem_budget_bytes)

    bt, kt, ts = _plan_tiles(B, K, S, C_out, x_item, out_item, w_item,
                             vmem_budget_bytes)

    b_blocks = B // bt
    s_blocks = pl.cdiv(S, ts)
    k_blocks = pl.cdiv(K, kt)
    grid = (b_blocks, s_blocks, k_blocks)

    # Raise the scoped VMEM limit (v5e default is 16 MiB); keep headroom on
    # v7x's 64 MiB physical VMEM.
    vmem_limit = int(min(max(vmem_budget_bytes * 3 // 2, 32 * 1024 * 1024),
                         56 * 1024 * 1024))

    cost = pl.CostEstimate(
        flops=2 * B * K * S * C_out,
        transcendentals=0,
        bytes_accessed=(B * K * S * x_item + B * C_out * S * out_item
                        + b_blocks * s_blocks * C_out * K * w_item
                        + C_out * 4),
    )

    kernel = functools.partial(_head_matmul_kernel, k_total=K)
    b_col = b_o.reshape(C_out, 1).astype(jnp.float32)

    def _call(single_buffer_consts):
        if single_buffer_consts and k_blocks == 1:
            w_spec = _const_spec((C_out, kt), lambda b, s, k: (0, k))
        else:
            w_spec = pl.BlockSpec((C_out, kt), lambda b, s, k: (0, k))
        if single_buffer_consts:
            b_spec = _const_spec((C_out, 1), lambda b, s, k: (0, 0))
        else:
            b_spec = pl.BlockSpec((C_out, 1), lambda b, s, k: (0, 0))

        return pl.pallas_call(
            kernel,
            out_shape=jax.ShapeDtypeStruct((B, C_out, S), out_dtype),
            grid=grid,
            in_specs=[
                pl.BlockSpec((bt, kt, ts), lambda b, s, k: (b, k, s)),
                w_spec,
                b_spec,
            ],
            out_specs=pl.BlockSpec((bt, C_out, ts), lambda b, s, k: (b, 0, s)),
            scratch_shapes=[pltpu.VMEM((bt, C_out, ts), jnp.float32)],
            compiler_params=pltpu.CompilerParams(
                dimension_semantics=("parallel", "parallel", "arbitrary"),
                vmem_limit_bytes=vmem_limit),
            cost_estimate=cost,
        )(x_bks, w_ok, b_col)

    try:
        return _call(True)
    except Exception:
        # Conservative fallback if single-buffered (Buffered(1)) constant
        # blocks are rejected by this JAX version.
        return _call(False)


class BlockHeadPallas:
    """BlockHead with conv_name='MLP_head' (a torch.nn.Linear head)."""

    def __init__(self, channels, keepSphericalDim=False, key=None,
                 vmem_budget_bytes=None):
        c_in, c_out = channels[0], channels[1]
        self.keepSphericalDim = keepSphericalDim
        self.vmem_budget_bytes = vmem_budget_bytes
        if key is None:
            key = jax.random.PRNGKey(0)
        k_w, k_b = jax.random.split(key)
        # torch.nn.Linear-style init: U(-1/sqrt(fan_in), +1/sqrt(fan_in))
        bound = 1.0 / math.sqrt(c_in)
        # stored as [C_in, C_out] (transpose of PyTorch's [C_out, C_in])
        self.w = jax.random.uniform(k_w, (c_in, c_out), jnp.float32, -bound, bound)
        self.b = jax.random.uniform(k_b, (c_out,), jnp.float32, -bound, bound)
        self.w_t = self.w.T                  # [C_out, C_in]
        self._w_eff_cache = {}               # (V, dtype) -> mean-folded weight

    def _w_eff(self, V, dtype):
        key = (int(V), jnp.dtype(dtype).name)
        if key not in self._w_eff_cache:
            # out[b,o,s] = sum_{c,v} (w[c,o]/V) * x[b,c,v,s]; k = c*V + v.
            self._w_eff_cache[key] = (jnp.repeat(self.w_t, V, axis=1) / V
                                      ).astype(dtype)
        return self._w_eff_cache[key]

    def __call__(self, x):
        # x: [B, C_in, V, X, Y, Z]
        B, C_in, V, X, Y, Z = x.shape
        C_out = self.w.shape[1]
        S = X * Y * Z
        if not self.keepSphericalDim:
            # Mean over V folded into the matmul (x read exactly once).
            x_r = x.reshape(B, C_in * V, S)                      # free reshape
            w_eff = self._w_eff(V, x.dtype)                      # cached
            y = head_matmul_pallas(x_r, w_eff, self.b,
                                   vmem_budget_bytes=self.vmem_budget_bytes)
            return y.reshape(B, C_out, 1, X, Y, Z)               # free reshape
        else:
            # Linear over C_in per (v, spatial) column; V folded into lanes.
            x_r = x.reshape(B, C_in, V * S)                      # free reshape
            y = head_matmul_pallas(x_r, self.w_t.astype(x.dtype), self.b,
                                   vmem_budget_bytes=self.vmem_budget_bytes)
            return y.reshape(B, C_out, V, X, Y, Z)               # free reshape


def _reference(x, w, b, keepSphericalDim):
    if not keepSphericalDim:
        x = jnp.mean(x, axis=2, keepdims=True)
    xt = jnp.transpose(x, (0, 2, 3, 4, 5, 1))
    yt = jnp.einsum("bvxyzc,cd->bvxyzd", xt, w,
                    precision=lax.Precision.HIGHEST) + b
    return jnp.transpose(yt, (0, 5, 1, 2, 3, 4))


if __name__ == "__main__":
    key = jax.random.PRNGKey(0)
    k_x, k_p, k_x2 = jax.random.split(key, 3)

    ok = True

    # 1) & 2) Small shapes, both keepSphericalDim settings (full-K path; the
    #    tiny 4x4x4 volume exercises the batch-grouping small-lane path).
    B, C_in, C_out, V, X, Y, Z = 2, 8, 16, 8, 4, 4, 4
    x = jax.random.normal(k_x, (B, C_in, V, X, Y, Z), dtype=jnp.float32)
    for keep in (False, True):
        head = BlockHeadPallas([C_in, C_out], keepSphericalDim=keep, key=k_p)
        out = jax.block_until_ready(head(x))
        ref = _reference(x, head.w, head.b, keep)
        expected = (B, C_out, V if keep else 1, X, Y, Z)
        if out.shape != expected:
            ok = False
            print(f"shape mismatch (keep={keep}): {out.shape} vs {expected}")
        elif not jnp.allclose(out, ref, atol=2e-2, rtol=2e-2):
            ok = False
            err = float(jnp.max(jnp.abs(out - ref)))
            print(f"value mismatch (keep={keep}) max_abs_err={err}")

    # 3) Force the K-tiled accumulator path (ragged K = C_in*V = 328) with an
    #    artificially small VMEM budget to validate it end to end.
    B2, V2 = 1, 41
    x2 = jax.random.normal(k_x2, (B2, C_in, V2, X, Y, Z), dtype=jnp.float32)
    head = BlockHeadPallas([C_in, C_out], keepSphericalDim=False, key=k_p,
                           vmem_budget_bytes=96 * 1024)
    out = jax.block_until_ready(head(x2))
    ref = _reference(x2, head.w, head.b, False)
    if out.shape != (B2, C_out, 1, X, Y, Z):
        ok = False
        print(f"shape mismatch (k-tiled): {out.shape}")
    elif not jnp.allclose(out, ref, atol=2e-2, rtol=2e-2):
        ok = False
        err = float(jnp.max(jnp.abs(out - ref)))
        print(f"value mismatch (k-tiled) max_abs_err={err}")

    if ok:
        print("KERNEL_OK")
</pallas_src>

<mosaic_0001>
module attributes {stable_mosaic.version = 11 : i64} {
  func.func @_head_matmul_kernel(%arg0: i32, %arg1: i32, %arg2: i32, %arg3: memref<2x64x64xf32, #tpu.memory_space<vmem>>, %arg4: memref<16x64xf32, #tpu.memory_space<vmem>>, %arg5: memref<16x1xf32, #tpu.memory_space<vmem>>, %arg6: memref<2x16x64xf32, #tpu.memory_space<vmem>>, %arg7: memref<2x16x64xf32, #tpu.memory_space<vmem>>) attributes {dimension_semantics = [#tpu.dimension_semantics<parallel>, #tpu.dimension_semantics<parallel>, #tpu.dimension_semantics<arbitrary>], iteration_bounds = array<i64: 1, 1, 1>, scalar_prefetch = 0 : i64, scratch_operands = 1 : i64, tpu.core_type = #tpu.core_type<tc>, window_params = [{transform_indices = @transform_0, window_bounds = array<i64: 2, 64, 64>}, {pipeline_mode = #tpu.pipeline_mode<synchronous>, transform_indices = @transform_1, window_bounds = array<i64: 16, 64>}, {pipeline_mode = #tpu.pipeline_mode<synchronous>, transform_indices = @transform_2, window_bounds = array<i64: 16, 1>}, {transform_indices = @transform_3, window_bounds = array<i64: 2, 16, 64>}]} {
    %c0_i32 = arith.constant 0 : i32
    %0 = arith.cmpi eq, %arg2, %c0_i32 : i32
    %1 = arith.extui %0 : i1 to i32
    %c0_i32_0 = arith.constant 0 : i32
    %2 = arith.cmpi ne, %1, %c0_i32_0 : i32
    scf.if %2 {
      %cst_22 = arith.constant 0.000000e+00 : f32
      %25 = vector.broadcast %cst_22 : f32 to vector<2x16x64xf32>
      %c0_23 = arith.constant 0 : index
      %c0_24 = arith.constant 0 : index
      %c0_25 = arith.constant 0 : index
      %26 = vector.load %arg7[%c0_23, %c0_24, %c0_25] : memref<2x16x64xf32, #tpu.memory_space<vmem>>, vector<2x16x64xf32>
      tpu.vector_store %arg7[%c0_23, %c0_24, %c0_25], %25 {strides = array<i32>} : memref<2x16x64xf32, #tpu.memory_space<vmem>>, vector<2x16x64xf32>,
    } else {
    }
    %c0 = arith.constant 0 : index
    %c0_1 = arith.constant 0 : index
    %3 = vector.load %arg4[%c0, %c0_1] : memref<16x64xf32, #tpu.memory_space<vmem>>, vector<16x64xf32>
    %c0_2 = arith.constant 0 : index
    %c0_3 = arith.constant 0 : index
    %c0_4 = arith.constant 0 : index
    %4 = vector.load %arg3[%c0_2, %c0_3, %c0_4] : memref<2x64x64xf32, #tpu.memory_space<vmem>>, vector<1x64x64xf32>
    %5 = vector.shape_cast %4 : vector<1x64x64xf32> to vector<64x64xf32>
    %c0_5 = arith.constant 0 : index
    %c0_6 = arith.constant 0 : index
    %c0_7 = arith.constant 0 : index
    %6 = vector.load %arg7[%c0_5, %c0_6, %c0_7] : memref<2x16x64xf32, #tpu.memory_space<vmem>>, vector<1x16x64xf32>
    %7 = vector.shape_cast %6 : vector<1x16x64xf32> to vector<16x64xf32>
    %cst = arith.constant dense<0.000000e+00> : vector<16x64xf32>
    %8 = tpu.matmul %3, %5, %cst {dimension_numbers = #tpu.dot_dimension_numbers<[1], [0], [0], [1], [0, 0, 1, 1], [], []>} : vector<16x64xf32>, vector<64x64xf32>, vector<16x64xf32> -> vector<16x64xf32>
    %9 = arith.addf %7, %8 : vector<16x64xf32>
    %c0_8 = arith.constant 0 : index
    %c0_9 = arith.constant 0 : index
    %c0_10 = arith.constant 0 : index
    %10 = vector.load %arg7[%c0_8, %c0_9, %c0_10] : memref<2x16x64xf32, #tpu.memory_space<vmem>>, vector<1x16x64xf32>
    %11 = vector.shape_cast %10 : vector<1x16x64xf32> to vector<16x64xf32>
    %12 = vector.shape_cast %9 : vector<16x64xf32> to vector<1x16x64xf32>
    tpu.vector_store %arg7[%c0_8, %c0_9, %c0_10], %12 {strides = array<i32>} : memref<2x16x64xf32, #tpu.memory_space<vmem>>, vector<1x16x64xf32>,
    %c1 = arith.constant 1 : index
    %c0_11 = arith.constant 0 : index
    %c0_12 = arith.constant 0 : index
    %13 = vector.load %arg3[%c1, %c0_11, %c0_12] : memref<2x64x64xf32, #tpu.memory_space<vmem>>, vector<1x64x64xf32>
    %14 = vector.shape_cast %13 : vector<1x64x64xf32> to vector<64x64xf32>
    %c1_13 = arith.constant 1 : index
    %c0_14 = arith.constant 0 : index
    %c0_15 = arith.constant 0 : index
    %15 = vector.load %arg7[%c1_13, %c0_14, %c0_15] : memref<2x16x64xf32, #tpu.memory_space<vmem>>, vector<1x16x64xf32>
    %16 = vector.shape_cast %15 : vector<1x16x64xf32> to vector<16x64xf32>
    %cst_16 = arith.constant dense<0.000000e+00> : vector<16x64xf32>
    %17 = tpu.matmul %3, %14, %cst_16 {dimension_numbers = #tpu.dot_dimension_numbers<[1], [0], [0], [1], [0, 0, 1, 1], [], []>} : vector<16x64xf32>, vector<64x64xf32>, vector<16x64xf32> -> vector<16x64xf32>
    %18 = arith.addf %16, %17 : vector<16x64xf32>
    %c1_17 = arith.constant 1 : index
    %c0_18 = arith.constant 0 : index
    %c0_19 = arith.constant 0 : index
    %19 = vector.load %arg7[%c1_17, %c0_18, %c0_19] : memref<2x16x64xf32, #tpu.memory_space<vmem>>, vector<1x16x64xf32>
    %20 = vector.shape_cast %19 : vector<1x16x64xf32> to vector<16x64xf32>
    %21 = vector.shape_cast %18 : vector<16x64xf32> to vector<1x16x64xf32>
    tpu.vector_store %arg7[%c1_17, %c0_18, %c0_19], %21 {strides = array<i32>} : memref<2x16x64xf32, #tpu.memory_space<vmem>>, vector<1x16x64xf32>,
    %c0_i32_20 = arith.constant 0 : i32
    %22 = arith.cmpi eq, %arg2, %c0_i32_20 : i32
    %23 = arith.extui %22 : i1 to i32
    %c0_i32_21 = arith.constant 0 : i32
    %24 = arith.cmpi ne, %23, %c0_i32_21 : i32
    scf.if %24 {
      %c0_22 = arith.constant 0 : index
      %c0_23 = arith.constant 0 : index
      %c0_24 = arith.constant 0 : index
      %25 = vector.load %arg7[%c0_22, %c0_23, %c0_24] : memref<2x16x64xf32, #tpu.memory_space<vmem>>, vector<2x16x64xf32>
      %c0_25 = arith.constant 0 : index
      %c0_26 = arith.constant 0 : index
      %26 = vector.load %arg5[%c0_25, %c0_26] : memref<16x1xf32, #tpu.memory_space<vmem>>, vector<16x1xf32>
      %27 = vector.shape_cast %26 : vector<16x1xf32> to vector<1x16x1xf32>
      %28 = vector.broadcast %27 : vector<1x16x1xf32> to vector<2x16x64xf32>
      %29 = arith.addf %25, %28 : vector<2x16x64xf32>
      %c0_27 = arith.constant 0 : index
      %c0_28 = arith.constant 0 : index
      %c0_29 = arith.constant 0 : index
      %30 = vector.load %arg6[%c0_27, %c0_28, %c0_29] : memref<2x16x64xf32, #tpu.memory_space<vmem>>, vector<2x16x64xf32>
      tpu.vector_store %arg6[%c0_27, %c0_28, %c0_29], %29 {strides = array<i32>} : memref<2x16x64xf32, #tpu.memory_space<vmem>>, vector<2x16x64xf32>,
    } else {
    }
    return
  }
  func.func @transform_0(%arg0: i32, %arg1: i32, %arg2: i32) -> (i32, i32, i32) {
    %c0_i32 = arith.constant 0 : i32
    return %arg0, %arg2, %arg1 : i32, i32, i32
  }
  func.func @transform_1(%arg0: i32, %arg1: i32, %arg2: i32) -> (i32, i32) {
    %c0_i32 = arith.constant 0 : i32
    %c0_i32_0 = arith.constant 0 : i32
    return %c0_i32, %arg2 : i32, i32
  }
  func.func @transform_2(%arg0: i32, %arg1: i32, %arg2: i32) -> (i32, i32) {
    %c0_i32 = arith.constant 0 : i32
    %c0_i32_0 = arith.constant 0 : i32
    %c0_i32_1 = arith.constant 0 : i32
    return %c0_i32, %c0_i32_0 : i32, i32
  }
  func.func @transform_3(%arg0: i32, %arg1: i32, %arg2: i32) -> (i32, i32, i32) {
    %c0_i32 = arith.constant 0 : i32
    %c0_i32_0 = arith.constant 0 : i32
    return %arg0, %c0_i32, %arg1 : i32, i32, i32
  }
}

module attributes {stable_mosaic.version = 11 : i64} {
  func.func @_head_matmul_kernel(%arg0: i32, %arg1: i32, %arg2: i32, %arg3: memref<2x64x64xf32, #tpu.memory_space<vmem>>, %arg4: memref<16x64xf32, #tpu.memory_space<vmem>>, %arg5: memref<16x1xf32, #tpu.memory_space<vmem>>, %arg6: memref<2x16x64xf32, #tpu.memory_space<vmem>>, %arg7: memref<2x16x64xf32, #tpu.memory_space<vmem>>) attributes {dimension_semantics = [#tpu.dimension_semantics<parallel>, #tpu.dimension_semantics<parallel>, #tpu.dimension_semantics<arbitrary>], iteration_bounds = array<i64: 1, 1, 1>, scalar_prefetch = 0 : i64, scratch_operands = 1 : i64, tpu.core_type = #tpu.core_type<tc>, window_params = [{transform_indices = @transform_0, window_bounds = array<i64: 2, 64, 64>}, {transform_indices = @transform_1, window_bounds = array<i64: 16, 64>}, {pipeline_mode = #tpu.pipeline_mode<synchronous>, transform_indices = @transform_2, window_bounds = array<i64: 16, 1>}, {transform_indices = @transform_3, window_bounds = array<i64: 2, 16, 64>}]} {
    %c0_i32 = arith.constant 0 : i32
    %0 = arith.cmpi eq, %arg2, %c0_i32 : i32
    %1 = arith.extui %0 : i1 to i32
    %c0_i32_0 = arith.constant 0 : i32
    %2 = arith.cmpi ne, %1, %c0_i32_0 : i32
    scf.if %2 {
      %cst_22 = arith.constant 0.000000e+00 : f32
      %25 = vector.broadcast %cst_22 : f32 to vector<2x16x64xf32>
      %c0_23 = arith.constant 0 : index
      %c0_24 = arith.constant 0 : index
      %c0_25 = arith.constant 0 : index
      %26 = vector.load %arg7[%c0_23, %c0_24, %c0_25] : memref<2x16x64xf32, #tpu.memory_space<vmem>>, vector<2x16x64xf32>
      tpu.vector_store %arg7[%c0_23, %c0_24, %c0_25], %25 {strides = array<i32>} : memref<2x16x64xf32, #tpu.memory_space<vmem>>, vector<2x16x64xf32>,
    } else {
    }
    %c0 = arith.constant 0 : index
    %c0_1 = arith.constant 0 : index
    %3 = vector.load %arg4[%c0, %c0_1] : memref<16x64xf32, #tpu.memory_space<vmem>>, vector<16x64xf32>
    %c0_2 = arith.constant 0 : index
    %c0_3 = arith.constant 0 : index
    %c0_4 = arith.constant 0 : index
    %4 = vector.load %arg3[%c0_2, %c0_3, %c0_4] : memref<2x64x64xf32, #tpu.memory_space<vmem>>, vector<1x64x64xf32>
    %5 = vector.shape_cast %4 : vector<1x64x64xf32> to vector<64x64xf32>
    %c0_5 = arith.constant 0 : index
    %c0_6 = arith.constant 0 : index
    %c0_7 = arith.constant 0 : index
    %6 = vector.load %arg7[%c0_5, %c0_6, %c0_7] : memref<2x16x64xf32, #tpu.memory_space<vmem>>, vector<1x16x64xf32>
    %7 = vector.shape_cast %6 : vector<1x16x64xf32> to vector<16x64xf32>
    %cst = arith.constant dense<0.000000e+00> : vector<16x64xf32>
    %8 = tpu.matmul %3, %5, %cst {dimension_numbers = #tpu.dot_dimension_numbers<[1], [0], [0], [1], [0, 0, 1, 1], [], []>} : vector<16x64xf32>, vector<64x64xf32>, vector<16x64xf32> -> vector<16x64xf32>
    %9 = arith.addf %7, %8 : vector<16x64xf32>
    %c0_8 = arith.constant 0 : index
    %c0_9 = arith.constant 0 : index
    %c0_10 = arith.constant 0 : index
    %10 = vector.load %arg7[%c0_8, %c0_9, %c0_10] : memref<2x16x64xf32, #tpu.memory_space<vmem>>, vector<1x16x64xf32>
    %11 = vector.shape_cast %10 : vector<1x16x64xf32> to vector<16x64xf32>
    %12 = vector.shape_cast %9 : vector<16x64xf32> to vector<1x16x64xf32>
    tpu.vector_store %arg7[%c0_8, %c0_9, %c0_10], %12 {strides = array<i32>} : memref<2x16x64xf32, #tpu.memory_space<vmem>>, vector<1x16x64xf32>,
    %c1 = arith.constant 1 : index
    %c0_11 = arith.constant 0 : index
    %c0_12 = arith.constant 0 : index
    %13 = vector.load %arg3[%c1, %c0_11, %c0_12] : memref<2x64x64xf32, #tpu.memory_space<vmem>>, vector<1x64x64xf32>
    %14 = vector.shape_cast %13 : vector<1x64x64xf32> to vector<64x64xf32>
    %c1_13 = arith.constant 1 : index
    %c0_14 = arith.constant 0 : index
    %c0_15 = arith.constant 0 : index
    %15 = vector.load %arg7[%c1_13, %c0_14, %c0_15] : memref<2x16x64xf32, #tpu.memory_space<vmem>>, vector<1x16x64xf32>
    %16 = vector.shape_cast %15 : vector<1x16x64xf32> to vector<16x64xf32>
    %cst_16 = arith.constant dense<0.000000e+00> : vector<16x64xf32>
    %17 = tpu.matmul %3, %14, %cst_16 {dimension_numbers = #tpu.dot_dimension_numbers<[1], [0], [0], [1], [0, 0, 1, 1], [], []>} : vector<16x64xf32>, vector<64x64xf32>, vector<16x64xf32> -> vector<16x64xf32>
    %18 = arith.addf %16, %17 : vector<16x64xf32>
    %c1_17 = arith.constant 1 : index
    %c0_18 = arith.constant 0 : index
    %c0_19 = arith.constant 0 : index
    %19 = vector.load %arg7[%c1_17, %c0_18, %c0_19] : memref<2x16x64xf32, #tpu.memory_space<vmem>>, vector<1x16x64xf32>
    %20 = vector.shape_cast %19 : vector<1x16x64xf32> to vector<16x64xf32>
    %21 = vector.shape_cast %18 : vector<16x64xf32> to vector<1x16x64xf32>
    tpu.vector_store %arg7[%c1_17, %c0_18, %c0_19], %21 {strides = array<i32>} : memref<2x16x64xf32, #tpu.memory_space<vmem>>, vector<1x16x64xf32>,
    %c0_i32_20 = arith.constant 0 : i32
    %22 = arith.cmpi eq, %arg2, %c0_i32_20 : i32
    %23 = arith.extui %22 : i1 to i32
    %c0_i32_21 = arith.constant 0 : i32
    %24 = arith.cmpi ne, %23, %c0_i32_21 : i32
    scf.if %24 {
      %c0_22 = arith.constant 0 : index
      %c0_23 = arith.constant 0 : index
      %c0_24 = arith.constant 0 : index
      %25 = vector.load %arg7[%c0_22, %c0_23, %c0_24] : memref<2x16x64xf32, #tpu.memory_space<vmem>>, vector<2x16x64xf32>
      %c0_25 = arith.constant 0 : index
      %c0_26 = arith.constant 0 : index
      %26 = vector.load %arg5[%c0_25, %c0_26] : memref<16x1xf32, #tpu.memory_space<vmem>>, vector<16x1xf32>
      %27 = vector.shape_cast %26 : vector<16x1xf32> to vector<1x16x1xf32>
      %28 = vector.broadcast %27 : vector<1x16x1xf32> to vector<2x16x64xf32>
      %29 = arith.addf %25, %28 : vector<2x16x64xf32>
      %c0_27 = arith.constant 0 : index
      %c0_28 = arith.constant 0 : index
      %c0_29 = arith.constant 0 : index
      %30 = vector.load %arg6[%c0_27, %c0_28, %c0_29] : memref<2x16x64xf32, #tpu.memory_space<vmem>>, vector<2x16x64xf32>
      tpu.vector_store %arg6[%c0_27, %c0_28, %c0_29], %29 {strides = array<i32>} : memref<2x16x64xf32, #tpu.memory_space<vmem>>, vector<2x16x64xf32>,
    } else {
    }
    return
  }
  func.func @transform_0(%arg0: i32, %arg1: i32, %arg2: i32) -> (i32, i32, i32) {
    %c0_i32 = arith.constant 0 : i32
    return %arg0, %arg2, %arg1 : i32, i32, i32
  }
  func.func @transform_1(%arg0: i32, %arg1: i32, %arg2: i32) -> (i32, i32) {
    %c0_i32 = arith.constant 0 : i32
    %c0_i32_0 = arith.constant 0 : i32
    return %c0_i32, %arg2 : i32, i32
  }
  func.func @transform_2(%arg0: i32, %arg1: i32, %arg2: i32) -> (i32, i32) {
    %c0_i32 = arith.constant 0 : i32
    %c0_i32_0 = arith.constant 0 : i32
    %c0_i32_1 = arith.constant 0 : i32
    return %c0_i32, %c0_i32_0 : i32, i32
  }
  func.func @transform_3(%arg0: i32, %arg1: i32, %arg2: i32) -> (i32, i32, i32) {
    %c0_i32 = arith.constant 0 : i32
    %c0_i32_0 = arith.constant 0 : i32
    return %arg0, %c0_i32, %arg1 : i32, i32, i32
  }
}

</mosaic_0001>

<llo_original>
// kernel: tpu_custom_call.1
$region0: #{tpu_custom_call.1}
  #allocation0 [shape = 'u32[]', space=smem, size = 0x4, offset = 0x4, fixed_abs, tag = 'smem constant byte address 0x4 - core index']
  #allocation1 [shape = 'u32[144,128]{1,0:T(1,128)}', space=vmem, size = 0x12000, scoped, tag = 'internal scratch']
  #allocation2 [shape = 'f32[2,16,64]{2,1,0:T(8,128)}', space=vmem, size = 0x4000, scoped, tag = 'scratch operand']
  %s0 = inlined_call_operand.hbm [shape: f32[2,64,64], index: 0, kind: input, shape index: {}]
  %s1 = inlined_call_operand.vmem [shape: f32[16,64], index: 1, kind: input, shape index: {}]
  %s2 = inlined_call_operand.vmem [shape: f32[16,1], index: 2, kind: input, shape index: {}]
  %s3 = inlined_call_operand.hbm [shape: f32[2,16,64], index: 3, kind: output, shape index: {}]
  %s4 = sld [smem:[#allocation0]]
  $region34: #{tpu_custom_call.1} parent=0
    _
  %s6 = ssub.s32 1, %s4
  %s7 = scalar_select 0, %s6, %s4
  $region1: #{tpu_custom_call.1} parent=0
    #allocation3 [shape = 'u8[65536]{0}', space=vmem, size = 0x10000, scoped, tag = 'input window, operand 0, single buffered']
    #allocation4 [shape = 's32[1]{0}', space=sflag, size = 0x4, scoped, tag = 'scoped memory for tpu_custom_call.1']
    #allocation5 [shape = 's32[1]{0}', space=sflag, size = 0x4, scoped, tag = 'scoped memory for tpu_custom_call.1']
    #allocation6 [shape = 'u8[16384]{0}', space=vmem, size = 0x4000, scoped, tag = 'output window, operand 0, single buffered']
    %8 = vsyncpa [#allocation4], 0
    %9 = vsyncpa [#allocation5], 0
    // Predicated region
    $region2: #{tpu_custom_call.1} parent=1 // pred_check
      _
    $region3: #{tpu_custom_call.1} parent=1 // pred_check_branch
      %11 = sbr.rel (0) target = $region5
    $region4: #{tpu_custom_call.1} parent=1 // pred_region
      %s13 = ssub.s32 2048, 2048
      %14 = vsyncadd [#allocation4], %s13
      %s15 = sshll.u32 [#allocation3], 4
      %s16 = int_to_ptr.vmem [resolvable:$true] %s15
      %21 = dma.hbm_to_vmem [thread:$0]  %s0, 2048, %s16, [#allocation4], 128, 128, 8
    $region5: #{tpu_custom_call.1} parent=1 // pred_fallthru
      _
    // Predicated region
    $region6: #{tpu_custom_call.1} parent=1 // pred_check
      _
    $region7: #{tpu_custom_call.1} parent=1 // pred_check_branch
      %23 = sbr.rel (0) target = $region9
    $region8: #{tpu_custom_call.1} parent=1 // pred_region
      _
    $region9: #{tpu_custom_call.1} parent=1 // pred_fallthru
      _
    // Predicated region
    $region10: #{tpu_custom_call.1} parent=1 // pred_check
      _
    $region11: #{tpu_custom_call.1} parent=1 // pred_check_branch
      %25 = sbr.rel (0) target = $region13
    $region12: #{tpu_custom_call.1} parent=1 // pred_region
      _
    $region13: #{tpu_custom_call.1} parent=1 // pred_fallthru
      _
    // Predicated region
    $region14: #{tpu_custom_call.1} parent=1 // pred_check
      _
    $region15: #{tpu_custom_call.1} parent=1 // pred_check_branch
      %27 = sbr.rel (0) target = $region17
    $region16: #{tpu_custom_call.1} parent=1 // pred_region
      %28 = dma.done [#allocation4], 2048
    $region17: #{tpu_custom_call.1} parent=1 // pred_fallthru
      _
    %p29 = scmp.eq.s32.totalorder 0, 0
    // Predicated region
    $region18: #{tpu_custom_call.1} parent=1 // pred_check
      %p30 = pneg %p29
    $region19: #{tpu_custom_call.1} parent=1 // pred_check_branch
      %32 = sbr.rel (%p30) target = $region21
    $region20: #{tpu_custom_call.1} parent=1 // pred_region
      %vm33 = vcmask 523264
      %34 = vst.msk [vmem:[#allocation2] sm:$0xff] %vm33, 0.0
      %35 = vst.msk [vmem:[#allocation2 + $0x8] sm:$0xff] %vm33, 0.0
      %36 = vst.msk [vmem:[#allocation2 + $0x10] sm:$0xff] %vm33, 0.0
      %37 = vst.msk [vmem:[#allocation2 + $0x18] sm:$0xff] %vm33, 0.0
    $region21: #{tpu_custom_call.1} parent=1 // pred_fallthru
      _
    %v38 = vld [vmem:[%s1] sm:$0xff]
    %v39 = vld [vmem:[%s1 + $0x8] sm:$0xff]
    %v40 = vld [vmem:[#allocation3] sm:$0xff]
    %v41 = vld [vmem:[#allocation3 + $0x8] sm:$0xff]
    %v42 = vld [vmem:[#allocation3 + $0x10] sm:$0xff]
    %v43 = vld [vmem:[#allocation3 + $0x18] sm:$0xff]
    %v44 = vld [vmem:[#allocation3 + $0x20] sm:$0xff]
    %v45 = vld [vmem:[#allocation3 + $0x28] sm:$0xff]
    %v46 = vld [vmem:[#allocation3 + $0x30] sm:$0xff]
    %v47 = vld [vmem:[#allocation3 + $0x38] sm:$0xff]
    %v48 = vld [vmem:[#allocation2] sm:$0xff]
    %v49 = vld [vmem:[#allocation2 + $0x8] sm:$0xff]
    %vm50 = vcmask 523264
    %v52 = vsel %vm50, %v38, 0
    %v55 = vsel %vm50, %v39, 0
    %57 = vmatprep.subr.mxu0 0.0
    %58 = vmatpush1.msra.mxu0 %v40
    %59 = vmatprep.subr.mxu0 0.0
    %60 = vmatpush1.msra.mxu0 %v41
    %61 = vmatprep.subr.mxu0 0.0
    %62 = vmatpush1.msra.mxu0 %v42
    %63 = vmatprep.subr.mxu0 0.0
    %64 = vmatpush1.msra.mxu0 %v43
    %65 = vmatprep.subr.mxu0 0.0
    %66 = vmatpush1.msra.mxu0 %v44
    %67 = vmatprep.subr.mxu0 0.0
    %68 = vmatpush1.msra.mxu0 %v45
    %69 = vmatprep.subr.mxu0 0.0
    %70 = vmatpush1.msra.mxu0 %v46
    %71 = vmatprep.subr.mxu0 0.0
    %72 = vmatpush1.msra.mxu0 %v47
    %73 = vmatprep.subr.mxu0 0.0
    %74 = vmatpush1.msra.mxu0 0.0
    %75 = vmatprep.subr.mxu0 0.0
    %76 = vmatpush1.msra.mxu0 0.0
    %77 = vmatprep.subr.mxu0 0.0
    %78 = vmatpush1.msra.mxu0 0.0
    %79 = vmatprep.subr.mxu0 0.0
    %80 = vmatpush1.msra.mxu0 0.0
    %81 = vmatprep.subr.mxu0 0.0
    %82 = vmatpush1.msra.mxu0 0.0
    %83 = vmatprep.subr.mxu0 0.0
    %84 = vmatpush1.msra.mxu0 0.0
    %85 = vmatprep.subr.mxu0 0.0
    %86 = vmatpush1.msra.mxu0 0.0
    %87 = vmatprep.subr.mxu0 0.0
    %88 = vmatpush1.msra.mxu0 0.0
    %89 = vmatprep.subr.mxu0 0.0
    %90 = vmatpush1.msra.mxu0 0.0
    %91 = vmatprep.subr.mxu0 0.0
    %92 = vmatpush1.msra.mxu0 0.0
    %93 = vmatprep.subr.mxu0 0.0
    %94 = vmatpush1.msra.mxu0 0.0
    %95 = vmatprep.subr.mxu0 0.0
    %96 = vmatpush1.msra.mxu0 0.0
    %97 = vmatprep.subr.mxu0 0.0
    %98 = vmatpush1.msra.mxu0 0.0
    %99 = vmatprep.subr.mxu0 0.0
    %100 = vmatpush1.msra.mxu0 0.0
    %101 = vmatprep.subr.mxu0 0.0
    %102 = vmatpush1.msra.mxu0 0.0
    %103 = vmatprep.subr.mxu0 0.0
    %104 = vmatpush1.msra.mxu0 0.0
    %105 = vmatprep.subr.mxu0 0.0
    %106 = vmatpush1.msra.mxu0 0.0
    %107 = vmatprep.subr.mxu0 0.0
    %108 = vmatpush1.msra.mxu0 0.0
    %109 = vmatprep.subr.mxu0 0.0
    %110 = vmatpush1.msra.mxu0 0.0
    %111 = vmatprep.subr.mxu0 0.0
    %112 = vmatpush1.msra.mxu0 0.0
    %113 = vmatprep.subr.mxu0 0.0
    %114 = vmatpush1.msra.mxu0 0.0
    %115 = vmatprep.subr.mxu0 0.0
    %116 = vmatpush1.msra.mxu0 0.0
    %117 = vmatprep.subr.mxu0 0.0
    %118 = vmatpush1.msra.mxu0 0.0
    %119 = vmatprep.subr.mxu0 0.0
    %120 = vmatpush1.msra.mxu0 0.0
    %121 = vmatprep.mubr.f32.mxu0 0.0
    %122 = vmatmul.mubr.f32.gmra.mrb[0].mxu0 %v52
    %v123 = vpop.f32.mrb[0].mxu0
    %v124 = vadd.f32 0.0, %v123
    %v125 = vpop.f32.mrb[0].mxu0
    %126 = vmatprep.mubr.f32.mxu0 0.0
    %127 = vmatmul.mubr.f32.gmra.mrb[0].mxu0 %v55
    %v128 = vpop.f32.mrb[0].mxu0
    %v129 = vadd.f32 0.0, %v128
    %v130 = vpop.f32.mrb[0].mxu0
    %131 = vdwg.mxu0
    %v132 = vadd.f32 %v48, %v124
    %v133 = vadd.f32 %v49, %v129
    %134 = vst.msk [vmem:[#allocation2] sm:$0xff] %vm50, %v132
    %135 = vst.msk [vmem:[#allocation2 + $0x8] sm:$0xff] %vm50, %v133
    %s136 = scalar_lea.vmem [#allocation3], 64
    %v137 = vld [vmem:[%s136] sm:$0xff]
    %v138 = vld [vmem:[%s136 + $0x8] sm:$0xff]
    %v139 = vld [vmem:[%s136 + $0x10] sm:$0xff]
    %v140 = vld [vmem:[%s136 + $0x18] sm:$0xff]
    %v141 = vld [vmem:[%s136 + $0x20] sm:$0xff]
    %v142 = vld [vmem:[%s136 + $0x28] sm:$0xff]
    %v143 = vld [vmem:[%s136 + $0x30] sm:$0xff]
    %v144 = vld [vmem:[%s136 + $0x38] sm:$0xff]
    %s145 = scalar_lea.vmem [#allocation2], 16
    %v146 = vld [vmem:[%s145] sm:$0xff]
    %v147 = vld [vmem:[%s145 + $0x8] sm:$0xff]
    %148 = vmatprep.subr.mxu0 0.0
    %149 = vmatpush1.msra.mxu0 %v137
    %150 = vmatprep.subr.mxu0 0.0
    %151 = vmatpush1.msra.mxu0 %v138
    %152 = vmatprep.subr.mxu0 0.0
    %153 = vmatpush1.msra.mxu0 %v139
    %154 = vmatprep.subr.mxu0 0.0
    %155 = vmatpush1.msra.mxu0 %v140
    %156 = vmatprep.subr.mxu0 0.0
    %157 = vmatpush1.msra.mxu0 %v141
    %158 = vmatprep.subr.mxu0 0.0
    %159 = vmatpush1.msra.mxu0 %v142
    %160 = vmatprep.subr.mxu0 0.0
    %161 = vmatpush1.msra.mxu0 %v143
    %162 = vmatprep.subr.mxu0 0.0
    %163 = vmatpush1.msra.mxu0 %v144
    %164 = vmatprep.subr.mxu0 0.0
    %165 = vmatpush1.msra.mxu0 0.0
    %166 = vmatprep.subr.mxu0 0.0
    %167 = vmatpush1.msra.mxu0 0.0
    %168 = vmatprep.subr.mxu0 0.0
    %169 = vmatpush1.msra.mxu0 0.0
    %170 = vmatprep.subr.mxu0 0.0
    %171 = vmatpush1.msra.mxu0 0.0
    %172 = vmatprep.subr.mxu0 0.0
    %173 = vmatpush1.msra.mxu0 0.0
    %174 = vmatprep.subr.mxu0 0.0
    %175 = vmatpush1.msra.mxu0 0.0
    %176 = vmatprep.subr.mxu0 0.0
    %177 = vmatpush1.msra.mxu0 0.0
    %178 = vmatprep.subr.mxu0 0.0
    %179 = vmatpush1.msra.mxu0 0.0
    %180 = vmatprep.subr.mxu0 0.0
    %181 = vmatpush1.msra.mxu0 0.0
    %182 = vmatprep.subr.mxu0 0.0
    %183 = vmatpush1.msra.mxu0 0.0
    %184 = vmatprep.subr.mxu0 0.0
    %185 = vmatpush1.msra.mxu0 0.0
    %186 = vmatprep.subr.mxu0 0.0
    %187 = vmatpush1.msra.mxu0 0.0
    %188 = vmatprep.subr.mxu0 0.0
    %189 = vmatpush1.msra.mxu0 0.0
    %190 = vmatprep.subr.mxu0 0.0
    %191 = vmatpush1.msra.mxu0 0.0
    %192 = vmatprep.subr.mxu0 0.0
    %193 = vmatpush1.msra.mxu0 0.0
    %194 = vmatprep.subr.mxu0 0.0
    %195 = vmatpush1.msra.mxu0 0.0
    %196 = vmatprep.subr.mxu0 0.0
    %197 = vmatpush1.msra.mxu0 0.0
    %198 = vmatprep.subr.mxu0 0.0
    %199 = vmatpush1.msra.mxu0 0.0
    %200 = vmatprep.subr.mxu0 0.0
    %201 = vmatpush1.msra.mxu0 0.0
    %202 = vmatprep.subr.mxu0 0.0
    %203 = vmatpush1.msra.mxu0 0.0
    %204 = vmatprep.subr.mxu0 0.0
    %205 = vmatpush1.msra.mxu0 0.0
    %206 = vmatprep.subr.mxu0 0.0
    %207 = vmatpush1.msra.mxu0 0.0
    %208 = vmatprep.subr.mxu0 0.0
    %209 = vmatpush1.msra.mxu0 0.0
    %210 = vmatprep.subr.mxu0 0.0
    %211 = vmatpush1.msra.mxu0 0.0
    %212 = vmatprep.mubr.f32.mxu0 0.0
    %213 = vmatmul.mubr.f32.gmra.mrb[0].mxu0 %v52
    %v214 = vpop.f32.mrb[0].mxu0
    %v215 = vadd.f32 0.0, %v214
    %v216 = vpop.f32.mrb[0].mxu0
    %217 = vmatprep.mubr.f32.mxu0 0.0
    %218 = vmatmul.mubr.f32.gmra.mrb[0].mxu0 %v55
    %v219 = vpop.f32.mrb[0].mxu0
    %v220 = vadd.f32 0.0, %v219
    %v221 = vpop.f32.mrb[0].mxu0
    %222 = vdwg.mxu0
    %v223 = vadd.f32 %v146, %v215
    %v224 = vadd.f32 %v147, %v220
    %225 = vst.msk [vmem:[%s145] sm:$0xff] %vm50, %v223
    %226 = vst.msk [vmem:[%s145 + $0x8] sm:$0xff] %vm50, %v224
    // Predicated region
    $region22: #{tpu_custom_call.1} parent=1 // pred_check
      %p227 = pneg %p29
    $region23: #{tpu_custom_call.1} parent=1 // pred_check_branch
      %229 = sbr.rel (%p227) target = $region25
    $region24: #{tpu_custom_call.1} parent=1 // pred_region
      %v230 = vld [vmem:[#allocation2] sm:$0xff]
      %v231 = vld [vmem:[#allocation2 + $0x8] sm:$0xff]
      %v232 = vld [vmem:[#allocation2 + $0x10] sm:$0xff]
      %v233 = vld [vmem:[#allocation2 + $0x18] sm:$0xff]
      %v234 = vld [vmem:[%s2] sm:$0xff]
      %v235 = vld [vmem:[%s2 + $0x8] sm:$0xff]
      %237 = vset.pattern.permute.xlu0 0
      %238 = vperm.xlu0 %237, %v234
      %v239 = vpop.permute.xlu0 %238
      %242 = vset.pattern.permute.xlu0 0
      %243 = vperm.xlu0 %242, %v235
      %v244 = vpop.permute.xlu0 %243
      %v246 = vadd.f32 %v230, %v239
      %v247 = vadd.f32 %v231, %v244
      %v248 = vadd.f32 %v232, %v239
      %v249 = vadd.f32 %v233, %v244
      %250 = vst.msk [vmem:[#allocation6] sm:$0xff] %vm50, %v246
      %251 = vst.msk [vmem:[#allocation6 + $0x8] sm:$0xff] %vm50, %v247
      %252 = vst.msk [vmem:[#allocation6 + $0x10] sm:$0xff] %vm50, %v248
      %253 = vst.msk [vmem:[#allocation6 + $0x18] sm:$0xff] %vm50, %v249
    $region25: #{tpu_custom_call.1} parent=1 // pred_fallthru
      _
    // Predicated region
    $region26: #{tpu_custom_call.1} parent=1 // pred_check
      _
    $region27: #{tpu_custom_call.1} parent=1 // pred_check_branch
      %255 = sbr.rel (0) target = $region29
    $region28: #{tpu_custom_call.1} parent=1 // pred_region
      %s257 = ssub.s32 512, 512
      %258 = vsyncadd [#allocation5], %s257
      %s259 = sshll.u32 [#allocation6], 4
      %s260 = int_to_ptr.vmem [resolvable:$true] %s259
      %265 = dma.vmem_to_hbm [thread:$0]  %s260, 512, %s3, [#allocation5], 128, 128, 8
    $region29: #{tpu_custom_call.1} parent=1 // pred_fallthru
      _
    // Predicated region
    $region30: #{tpu_custom_call.1} parent=1 // pred_check
      _
    $region31: #{tpu_custom_call.1} parent=1 // pred_check_branch
      %267 = sbr.rel (0) target = $region33
    $region32: #{tpu_custom_call.1} parent=1 // pred_region
      %268 = dma.done [#allocation5], 512
    $region33: #{tpu_custom_call.1} parent=1 // pred_fallthru
      _
    %269 = vsyncpa [#allocation4], 1
    %270 = vsyncpa [#allocation5], 1

// kernel: tpu_custom_call.1
$region0: #{tpu_custom_call.1}
  #allocation0 [shape = 'u32[]', space=smem, size = 0x4, offset = 0x4, fixed_abs, tag = 'smem constant byte address 0x4 - core index']
  #allocation1 [shape = 'u32[144,128]{1,0:T(1,128)}', space=vmem, size = 0x12000, scoped, tag = 'internal scratch']
  #allocation2 [shape = 'f32[2,16,64]{2,1,0:T(8,128)}', space=vmem, size = 0x4000, scoped, tag = 'scratch operand']
  %s0 = inlined_call_operand.hbm [shape: f32[2,64,64], index: 0, kind: input, shape index: {}]
  %s1 = inlined_call_operand.vmem [shape: f32[16,64], index: 1, kind: input, shape index: {}]
  %s2 = inlined_call_operand.vmem [shape: f32[16,1], index: 2, kind: input, shape index: {}]
  %s3 = inlined_call_operand.hbm [shape: f32[2,16,64], index: 3, kind: output, shape index: {}]
  %s4 = sld [smem:[#allocation0]]
  $region34: #{tpu_custom_call.1} parent=0
    _
  %s6 = ssub.s32 1, %s4
  %s7 = scalar_select 0, %s6, %s4
  $region1: #{tpu_custom_call.1} parent=0
    #allocation3 [shape = 'u8[65536]{0}', space=vmem, size = 0x10000, scoped, tag = 'input window, operand 0, single buffered']
    #allocation4 [shape = 's32[1]{0}', space=sflag, size = 0x4, scoped, tag = 'scoped memory for tpu_custom_call.1']
    #allocation5 [shape = 's32[1]{0}', space=sflag, size = 0x4, scoped, tag = 'scoped memory for tpu_custom_call.1']
    #allocation6 [shape = 'u8[16384]{0}', space=vmem, size = 0x4000, scoped, tag = 'output window, operand 0, single buffered']
    %8 = vsyncpa [#allocation4], 0
    %9 = vsyncpa [#allocation5], 0
    // Predicated region
    $region2: #{tpu_custom_call.1} parent=1 // pred_check
      _
    $region3: #{tpu_custom_call.1} parent=1 // pred_check_branch
      %11 = sbr.rel (0) target = $region5
    $region4: #{tpu_custom_call.1} parent=1 // pred_region
      %s13 = ssub.s32 2048, 2048
      %14 = vsyncadd [#allocation4], %s13
      %s15 = sshll.u32 [#allocation3], 4
      %s16 = int_to_ptr.vmem [resolvable:$true] %s15
      %21 = dma.hbm_to_vmem [thread:$0]  %s0, 2048, %s16, [#allocation4], 128, 128, 8
    $region5: #{tpu_custom_call.1} parent=1 // pred_fallthru
      _
    // Predicated region
    $region6: #{tpu_custom_call.1} parent=1 // pred_check
      _
    $region7: #{tpu_custom_call.1} parent=1 // pred_check_branch
      %23 = sbr.rel (0) target = $region9
    $region8: #{tpu_custom_call.1} parent=1 // pred_region
      _
    $region9: #{tpu_custom_call.1} parent=1 // pred_fallthru
      _
    // Predicated region
    $region10: #{tpu_custom_call.1} parent=1 // pred_check
      _
    $region11: #{tpu_custom_call.1} parent=1 // pred_check_branch
      %25 = sbr.rel (0) target = $region13
    $region12: #{tpu_custom_call.1} parent=1 // pred_region
      _
    $region13: #{tpu_custom_call.1} parent=1 // pred_fallthru
      _
    // Predicated region
    $region14: #{tpu_custom_call.1} parent=1 // pred_check
      _
    $region15: #{tpu_custom_call.1} parent=1 // pred_check_branch
      %27 = sbr.rel (0) target = $region17
    $region16: #{tpu_custom_call.1} parent=1 // pred_region
      %28 = dma.done [#allocation4], 2048
    $region17: #{tpu_custom_call.1} parent=1 // pred_fallthru
      _
    %p29 = scmp.eq.s32.totalorder 0, 0
    // Predicated region
    $region18: #{tpu_custom_call.1} parent=1 // pred_check
      %p30 = pneg %p29
    $region19: #{tpu_custom_call.1} parent=1 // pred_check_branch
      %32 = sbr.rel (%p30) target = $region21
    $region20: #{tpu_custom_call.1} parent=1 // pred_region
      %vm33 = vcmask 523264
      %34 = vst.msk [vmem:[#allocation2] sm:$0xff] %vm33, 0.0
      %35 = vst.msk [vmem:[#allocation2 + $0x8] sm:$0xff] %vm33, 0.0
      %36 = vst.msk [vmem:[#allocation2 + $0x10] sm:$0xff] %vm33, 0.0
      %37 = vst.msk [vmem:[#allocation2 + $0x18] sm:$0xff] %vm33, 0.0
    $region21: #{tpu_custom_call.1} parent=1 // pred_fallthru
      _
    %v38 = vld [vmem:[%s1] sm:$0xff]
    %v39 = vld [vmem:[%s1 + $0x8] sm:$0xff]
    %v40 = vld [vmem:[#allocation3] sm:$0xff]
    %v41 = vld [vmem:[#allocation3 + $0x8] sm:$0xff]
    %v42 = vld [vmem:[#allocation3 + $0x10] sm:$0xff]
    %v43 = vld [vmem:[#allocation3 + $0x18] sm:$0xff]
    %v44 = vld [vmem:[#allocation3 + $0x20] sm:$0xff]
    %v45 = vld [vmem:[#allocation3 + $0x28] sm:$0xff]
    %v46 = vld [vmem:[#allocation3 + $0x30] sm:$0xff]
    %v47 = vld [vmem:[#allocation3 + $0x38] sm:$0xff]
    %v48 = vld [vmem:[#allocation2] sm:$0xff]
    %v49 = vld [vmem:[#allocation2 + $0x8] sm:$0xff]
    %vm50 = vcmask 523264
    %v52 = vsel %vm50, %v38, 0
    %v55 = vsel %vm50, %v39, 0
    %57 = vmatprep.subr.mxu0 0.0
    %58 = vmatpush1.msra.mxu0 %v40
    %59 = vmatprep.subr.mxu0 0.0
    %60 = vmatpush1.msra.mxu0 %v41
    %61 = vmatprep.subr.mxu0 0.0
    %62 = vmatpush1.msra.mxu0 %v42
    %63 = vmatprep.subr.mxu0 0.0
    %64 = vmatpush1.msra.mxu0 %v43
    %65 = vmatprep.subr.mxu0 0.0
    %66 = vmatpush1.msra.mxu0 %v44
    %67 = vmatprep.subr.mxu0 0.0
    %68 = vmatpush1.msra.mxu0 %v45
    %69 = vmatprep.subr.mxu0 0.0
    %70 = vmatpush1.msra.mxu0 %v46
    %71 = vmatprep.subr.mxu0 0.0
    %72 = vmatpush1.msra.mxu0 %v47
    %73 = vmatprep.subr.mxu0 0.0
    %74 = vmatpush1.msra.mxu0 0.0
    %75 = vmatprep.subr.mxu0 0.0
    %76 = vmatpush1.msra.mxu0 0.0
    %77 = vmatprep.subr.mxu0 0.0
    %78 = vmatpush1.msra.mxu0 0.0
    %79 = vmatprep.subr.mxu0 0.0
    %80 = vmatpush1.msra.mxu0 0.0
    %81 = vmatprep.subr.mxu0 0.0
    %82 = vmatpush1.msra.mxu0 0.0
    %83 = vmatprep.subr.mxu0 0.0
    %84 = vmatpush1.msra.mxu0 0.0
    %85 = vmatprep.subr.mxu0 0.0
    %86 = vmatpush1.msra.mxu0 0.0
    %87 = vmatprep.subr.mxu0 0.0
    %88 = vmatpush1.msra.mxu0 0.0
    %89 = vmatprep.subr.mxu0 0.0
    %90 = vmatpush1.msra.mxu0 0.0
    %91 = vmatprep.subr.mxu0 0.0
    %92 = vmatpush1.msra.mxu0 0.0
    %93 = vmatprep.subr.mxu0 0.0
    %94 = vmatpush1.msra.mxu0 0.0
    %95 = vmatprep.subr.mxu0 0.0
    %96 = vmatpush1.msra.mxu0 0.0
    %97 = vmatprep.subr.mxu0 0.0
    %98 = vmatpush1.msra.mxu0 0.0
    %99 = vmatprep.subr.mxu0 0.0
    %100 = vmatpush1.msra.mxu0 0.0
    %101 = vmatprep.subr.mxu0 0.0
    %102 = vmatpush1.msra.mxu0 0.0
    %103 = vmatprep.subr.mxu0 0.0
    %104 = vmatpush1.msra.mxu0 0.0
    %105 = vmatprep.subr.mxu0 0.0
    %106 = vmatpush1.msra.mxu0 0.0
    %107 = vmatprep.subr.mxu0 0.0
    %108 = vmatpush1.msra.mxu0 0.0
    %109 = vmatprep.subr.mxu0 0.0
    %110 = vmatpush1.msra.mxu0 0.0
    %111 = vmatprep.subr.mxu0 0.0
    %112 = vmatpush1.msra.mxu0 0.0
    %113 = vmatprep.subr.mxu0 0.0
    %114 = vmatpush1.msra.mxu0 0.0
    %115 = vmatprep.subr.mxu0 0.0
    %116 = vmatpush1.msra.mxu0 0.0
    %117 = vmatprep.subr.mxu0 0.0
    %118 = vmatpush1.msra.mxu0 0.0
    %119 = vmatprep.subr.mxu0 0.0
    %120 = vmatpush1.msra.mxu0 0.0
    %121 = vmatprep.mubr.f32.mxu0 0.0
    %122 = vmatmul.mubr.f32.gmra.mrb[0].mxu0 %v52
    %v123 = vpop.f32.mrb[0].mxu0
    %v124 = vadd.f32 0.0, %v123
    %v125 = vpop.f32.mrb[0].mxu0
    %126 = vmatprep.mubr.f32.mxu0 0.0
    %127 = vmatmul.mubr.f32.gmra.mrb[0].mxu0 %v55
    %v128 = vpop.f32.mrb[0].mxu0
    %v129 = vadd.f32 0.0, %v128
    %v130 = vpop.f32.mrb[0].mxu0
    %131 = vdwg.mxu0
    %v132 = vadd.f32 %v48, %v124
    %v133 = vadd.f32 %v49, %v129
    %134 = vst.msk [vmem:[#allocation2] sm:$0xff] %vm50, %v132
    %135 = vst.msk [vmem:[#allocation2 + $0x8] sm:$0xff] %vm50, %v133
    %s136 = scalar_lea.vmem [#allocation3], 64
    %v137 = vld [vmem:[%s136] sm:$0xff]
    %v138 = vld [vmem:[%s136 + $0x8] sm:$0xff]
    %v139 = vld [vmem:[%s136 + $0x10] sm:$0xff]
    %v140 = vld [vmem:[%s136 + $0x18] sm:$0xff]
    %v141 = vld [vmem:[%s136 + $0x20] sm:$0xff]
    %v142 = vld [vmem:[%s136 + $0x28] sm:$0xff]
    %v143 = vld [vmem:[%s136 + $0x30] sm:$0xff]
    %v144 = vld [vmem:[%s136 + $0x38] sm:$0xff]
    %s145 = scalar_lea.vmem [#allocation2], 16
    %v146 = vld [vmem:[%s145] sm:$0xff]
    %v147 = vld [vmem:[%s145 + $0x8] sm:$0xff]
    %148 = vmatprep.subr.mxu0 0.0
    %149 = vmatpush1.msra.mxu0 %v137
    %150 = vmatprep.subr.mxu0 0.0
    %151 = vmatpush1.msra.mxu0 %v138
    %152 = vmatprep.subr.mxu0 0.0
    %153 = vmatpush1.msra.mxu0 %v139
    %154 = vmatprep.subr.mxu0 0.0
    %155 = vmatpush1.msra.mxu0 %v140
    %156 = vmatprep.subr.mxu0 0.0
    %157 = vmatpush1.msra.mxu0 %v141
    %158 = vmatprep.subr.mxu0 0.0
    %159 = vmatpush1.msra.mxu0 %v142
    %160 = vmatprep.subr.mxu0 0.0
    %161 = vmatpush1.msra.mxu0 %v143
    %162 = vmatprep.subr.mxu0 0.0
    %163 = vmatpush1.msra.mxu0 %v144
    %164 = vmatprep.subr.mxu0 0.0
    %165 = vmatpush1.msra.mxu0 0.0
    %166 = vmatprep.subr.mxu0 0.0
    %167 = vmatpush1.msra.mxu0 0.0
    %168 = vmatprep.subr.mxu0 0.0
    %169 = vmatpush1.msra.mxu0 0.0
    %170 = vmatprep.subr.mxu0 0.0
    %171 = vmatpush1.msra.mxu0 0.0
    %172 = vmatprep.subr.mxu0 0.0
    %173 = vmatpush1.msra.mxu0 0.0
    %174 = vmatprep.subr.mxu0 0.0
    %175 = vmatpush1.msra.mxu0 0.0
    %176 = vmatprep.subr.mxu0 0.0
    %177 = vmatpush1.msra.mxu0 0.0
    %178 = vmatprep.subr.mxu0 0.0
    %179 = vmatpush1.msra.mxu0 0.0
    %180 = vmatprep.subr.mxu0 0.0
    %181 = vmatpush1.msra.mxu0 0.0
    %182 = vmatprep.subr.mxu0 0.0
    %183 = vmatpush1.msra.mxu0 0.0
    %184 = vmatprep.subr.mxu0 0.0
    %185 = vmatpush1.msra.mxu0 0.0
    %186 = vmatprep.subr.mxu0 0.0
    %187 = vmatpush1.msra.mxu0 0.0
    %188 = vmatprep.subr.mxu0 0.0
    %189 = vmatpush1.msra.mxu0 0.0
    %190 = vmatprep.subr.mxu0 0.0
    %191 = vmatpush1.msra.mxu0 0.0
    %192 = vmatprep.subr.mxu0 0.0
    %193 = vmatpush1.msra.mxu0 0.0
    %194 = vmatprep.subr.mxu0 0.0
    %195 = vmatpush1.msra.mxu0 0.0
    %196 = vmatprep.subr.mxu0 0.0
    %197 = vmatpush1.msra.mxu0 0.0
    %198 = vmatprep.subr.mxu0 0.0
    %199 = vmatpush1.msra.mxu0 0.0
    %200 = vmatprep.subr.mxu0 0.0
    %201 = vmatpush1.msra.mxu0 0.0
    %202 = vmatprep.subr.mxu0 0.0
    %203 = vmatpush1.msra.mxu0 0.0
    %204 = vmatprep.subr.mxu0 0.0
    %205 = vmatpush1.msra.mxu0 0.0
    %206 = vmatprep.subr.mxu0 0.0
    %207 = vmatpush1.msra.mxu0 0.0
    %208 = vmatprep.subr.mxu0 0.0
    %209 = vmatpush1.msra.mxu0 0.0
    %210 = vmatprep.subr.mxu0 0.0
    %211 = vmatpush1.msra.mxu0 0.0
    %212 = vmatprep.mubr.f32.mxu0 0.0
    %213 = vmatmul.mubr.f32.gmra.mrb[0].mxu0 %v52
    %v214 = vpop.f32.mrb[0].mxu0
    %v215 = vadd.f32 0.0, %v214
    %v216 = vpop.f32.mrb[0].mxu0
    %217 = vmatprep.mubr.f32.mxu0 0.0
    %218 = vmatmul.mubr.f32.gmra.mrb[0].mxu0 %v55
    %v219 = vpop.f32.mrb[0].mxu0
    %v220 = vadd.f32 0.0, %v219
    %v221 = vpop.f32.mrb[0].mxu0
    %222 = vdwg.mxu0
    %v223 = vadd.f32 %v146, %v215
    %v224 = vadd.f32 %v147, %v220
    %225 = vst.msk [vmem:[%s145] sm:$0xff] %vm50, %v223
    %226 = vst.msk [vmem:[%s145 + $0x8] sm:$0xff] %vm50, %v224
    // Predicated region
    $region22: #{tpu_custom_call.1} parent=1 // pred_check
      %p227 = pneg %p29
    $region23: #{tpu_custom_call.1} parent=1 // pred_check_branch
      %229 = sbr.rel (%p227) target = $region25
    $region24: #{tpu_custom_call.1} parent=1 // pred_region
      %v230 = vld [vmem:[#allocation2] sm:$0xff]
      %v231 = vld [vmem:[#allocation2 + $0x8] sm:$0xff]
      %v232 = vld [vmem:[#allocation2 + $0x10] sm:$0xff]
      %v233 = vld [vmem:[#allocation2 + $0x18] sm:$0xff]
      %v234 = vld [vmem:[%s2] sm:$0xff]
      %v235 = vld [vmem:[%s2 + $0x8] sm:$0xff]
      %237 = vset.pattern.permute.xlu0 0
      %238 = vperm.xlu0 %237, %v234
      %v239 = vpop.permute.xlu0 %238
      %242 = vset.pattern.permute.xlu0 0
      %243 = vperm.xlu0 %242, %v235
      %v244 = vpop.permute.xlu0 %243
      %v246 = vadd.f32 %v230, %v239
      %v247 = vadd.f32 %v231, %v244
      %v248 = vadd.f32 %v232, %v239
      %v249 = vadd.f32 %v233, %v244
      %250 = vst.msk [vmem:[#allocation6] sm:$0xff] %vm50, %v246
      %251 = vst.msk [vmem:[#allocation6 + $0x8] sm:$0xff] %vm50, %v247
      %252 = vst.msk [vmem:[#allocation6 + $0x10] sm:$0xff] %vm50, %v248
      %253 = vst.msk [vmem:[#allocation6 + $0x18] sm:$0xff] %vm50, %v249
    $region25: #{tpu_custom_call.1} parent=1 // pred_fallthru
      _
    // Predicated region
    $region26: #{tpu_custom_call.1} parent=1 // pred_check
      _
    $region27: #{tpu_custom_call.1} parent=1 // pred_check_branch
      %255 = sbr.rel (0) target = $region29
    $region28: #{tpu_custom_call.1} parent=1 // pred_region
      %s257 = ssub.s32 512, 512
      %258 = vsyncadd [#allocation5], %s257
      %s259 = sshll.u32 [#allocation6], 4
      %s260 = int_to_ptr.vmem [resolvable:$true] %s259
      %265 = dma.vmem_to_hbm [thread:$0]  %s260, 512, %s3, [#allocation5], 128, 128, 8
    $region29: #{tpu_custom_call.1} parent=1 // pred_fallthru
      _
    // Predicated region
    $region30: #{tpu_custom_call.1} parent=1 // pred_check
      _
    $region31: #{tpu_custom_call.1} parent=1 // pred_check_branch
      %267 = sbr.rel (0) target = $region33
    $region32: #{tpu_custom_call.1} parent=1 // pred_region
      %268 = dma.done [#allocation5], 512
    $region33: #{tpu_custom_call.1} parent=1 // pred_fallthru
      _
    %269 = vsyncpa [#allocation4], 1
    %270 = vsyncpa [#allocation5], 1

</llo_original>
